<compile_context>
chip_gen: v5e
topology: v5e:2x2
jax: 0.10.0
libtpu: 0.0.40
codegen_flags: <defaults>
</compile_context>

<pallas_src>
import jax
import jax.numpy as jnp
from jax.experimental import pallas as pl
from jax.experimental.pallas import tpu as pltpu


def _round_up(x, m):
    return (x + m - 1) // m * m


def _linear_kernel(x_ref, w_ref, b_ref, o_ref):
    # x_ref: [tm, tk] bf16 input tile
    # w_ref: [tk, tn] bf16 weight tile (pre-transposed [K, N] layout)
    # b_ref: [1,  tn] f32 bias tile
    # o_ref: [tm, tn] f32 output tile; block index is constant across the K
    #        grid axis, so it stays resident in VMEM and doubles as the
    #        accumulator (no separate scratch needed).
    k = pl.program_id(2)

    @pl.when(k == 0)
    def _():
        o_ref[...] = jnp.zeros_like(o_ref)

    o_ref[...] += jnp.dot(
        x_ref[...], w_ref[...], preferred_element_type=jnp.float32
    )

    @pl.when(k == pl.num_programs(2) - 1)
    def _():
        o_ref[...] += b_ref[...]


def prepare_dummy_expert_params(weight, bias, *, tn=512, tk=1024):
    """One-time (parameter-load-time) preparation.

    weight: [dim_out, dim_in]  (PyTorch nn.Linear layout)
    bias:   [dim_out]

    Pads to lane-dense multiples of 128, transposes to the MXU-native [K, N]
    RHS layout and casts to bf16 so the per-forward path never has to touch
    (pad / transpose / cast) the full weight again.
    """
    dim_out, dim_in = weight.shape

    kp = _round_up(dim_in, 128)
    np_ = _round_up(dim_out, 128)
    tk_ = min(tk, kp)
    tn_ = min(tn, np_)
    kp = _round_up(kp, tk_)
    np_ = _round_up(np_, tn_)

    w_kn = weight.T  # [dim_in, dim_out] = [K, N]
    if (kp, np_) != (dim_in, dim_out):
        w_kn = jnp.pad(w_kn, ((0, kp - dim_in), (0, np_ - dim_out)))
    w_kn = w_kn.astype(jnp.bfloat16)

    b_p = bias
    if np_ != dim_out:
        b_p = jnp.pad(bias, (0, np_ - dim_out))
    b2d = b_p.reshape(1, np_).astype(jnp.float32)

    return dict(
        w_kn=w_kn, bias2d=b2d,
        dim_in=dim_in, dim_out=dim_out,
        kp=kp, np_=np_, tk=tk_, tn=tn_,
    )


def dummy_expert_forward(x, params, *, tm=256):
    """y = x @ weight.T + bias (torch.nn.Linear semantics), f32 output.

    Uses bf16 MXU inputs with f32 accumulation (not bit-parity with a pure
    f32 reference; ~1e-2 level agreement).
    """
    w_kn = params["w_kn"]
    b2d = params["bias2d"]
    dim_in, dim_out = params["dim_in"], params["dim_out"]
    kp, np_ = params["kp"], params["np_"]
    tk_, tn_ = params["tk"], params["tn"]

    orig_lead = x.shape[:-1]
    x2d = x.reshape(-1, dim_in).astype(jnp.bfloat16)
    tokens = x2d.shape[0]

    mp = _round_up(tokens, 8)
    tm_ = min(tm, mp)
    mp = _round_up(mp, tm_)
    if (mp, kp) != (tokens, dim_in):
        x2d = jnp.pad(x2d, ((0, mp - tokens), (0, kp - dim_in)))

    # Guarantee >= 2 blocks on a parallel axis so both v7x TensorCores get
    # work when the padded problem is a single tile (harmless one extra
    # ~0.35us grid step on single-TC v5e/v6e).
    if mp // tm_ == 1 and np_ // tn_ == 1:
        if tn_ % 256 == 0:
            tn_ //= 2
        elif tm_ % 16 == 0:
            tm_ //= 2

    grid = (mp // tm_, np_ // tn_, kp // tk_)

    # Resident-VMEM estimate (double-buffered x/W/bias/out tiles) -> scoped
    # limit.  Capped at 48 MiB so it is safe on v7x (64 MiB physical VMEM).
    est = (2 * tm_ * tk_ * 2        # x tiles, bf16
           + 2 * tk_ * tn_ * 2      # W tiles, bf16
           + 2 * tm_ * tn_ * 4      # out tiles, f32
           + 2 * tn_ * 4)           # bias tiles, f32
    vmem_limit = min(48 * 1024 * 1024, max(32 * 1024 * 1024, 2 * est))

    out = pl.pallas_call(
        _linear_kernel,
        out_shape=jax.ShapeDtypeStruct((mp, np_), jnp.float32),
        grid_spec=pltpu.PrefetchScalarGridSpec(
            num_scalar_prefetch=0,
            grid=grid,
            in_specs=[
                pl.BlockSpec((tm_, tk_), lambda i, j, k: (i, k)),  # x   [M, K]
                pl.BlockSpec((tk_, tn_), lambda i, j, k: (k, j)),  # W.T [K, N]
                pl.BlockSpec((1, tn_), lambda i, j, k: (0, j)),    # bias
            ],
            out_specs=pl.BlockSpec((tm_, tn_), lambda i, j, k: (i, j)),
        ),
        compiler_params=pltpu.CompilerParams(
            dimension_semantics=("parallel", "parallel", "arbitrary"),
            vmem_limit_bytes=vmem_limit,
        ),
    )(x2d, w_kn, b2d)

    out = out[:tokens, :dim_out]
    return out.reshape(orig_lead + (dim_out,))


if __name__ == "__main__":
    # Small shapes consistent with the module: batch=2, seq=8, dim=32.
    batch, seq, dim = 2, 8, 32

    key = jax.random.PRNGKey(0)
    kx, kw, kb = jax.random.split(key, 3)

    # Deterministic parameter init mimicking torch.nn.Linear defaults
    # (uniform(-1/sqrt(dim), 1/sqrt(dim))).
    bound = 1.0 / (dim ** 0.5)
    weight = jax.random.uniform(kw, (dim, dim), jnp.float32, -bound, bound)
    bias = jax.random.uniform(kb, (dim,), jnp.float32, -bound, bound)

    x = jax.random.normal(kx, (batch, seq, dim), jnp.float32)

    # One-time parameter prep (pad + transpose to [K, N] + bf16 cast).
    params = prepare_dummy_expert_params(weight, bias)

    y = dummy_expert_forward(x, params)
    jax.block_until_ready(y)

    # Correctness check against plain JAX f32 reference. The kernel uses bf16
    # MXU inputs with f32 accumulation, so compare at bf16-level tolerance.
    y_ref = x @ weight.T + bias
    assert y.shape == (batch, seq, dim)
    assert jnp.allclose(y, y_ref, atol=2e-2, rtol=2e-2), (
        float(jnp.max(jnp.abs(y - y_ref))))

    print("KERNEL_OK")
</pallas_src>

<mosaic_0001>
module attributes {stable_mosaic.version = 11 : i64} {
  func.func @_linear_kernel(%arg0: i32, %arg1: i32, %arg2: i32, %arg3: memref<8x128xbf16, #tpu.memory_space<vmem>>, %arg4: memref<128x128xbf16, #tpu.memory_space<vmem>>, %arg5: memref<1x128xf32, #tpu.memory_space<vmem>>, %arg6: memref<8x128xf32, #tpu.memory_space<vmem>>) attributes {dimension_semantics = [#tpu.dimension_semantics<parallel>, #tpu.dimension_semantics<parallel>, #tpu.dimension_semantics<arbitrary>], iteration_bounds = array<i64: 2, 1, 1>, scalar_prefetch = 0 : i64, scratch_operands = 0 : i64, tpu.core_type = #tpu.core_type<tc>, window_params = [{transform_indices = @transform_0, window_bounds = array<i64: 8, 128>}, {transform_indices = @transform_1, window_bounds = array<i64: 128, 128>}, {transform_indices = @transform_2, window_bounds = array<i64: 1, 128>}, {transform_indices = @transform_3, window_bounds = array<i64: 8, 128>}]} {
    %c0_i32 = arith.constant 0 : i32
    %0 = arith.cmpi eq, %arg2, %c0_i32 : i32
    %1 = arith.extui %0 : i1 to i32
    %c0_i32_0 = arith.constant 0 : i32
    %2 = arith.cmpi ne, %1, %c0_i32_0 : i32
    scf.if %2 {
      %cst_10 = arith.constant 0.000000e+00 : f32
      %12 = vector.broadcast %cst_10 : f32 to vector<8x128xf32>
      %c0_11 = arith.constant 0 : index
      %c0_12 = arith.constant 0 : index
      %13 = vector.load %arg6[%c0_11, %c0_12] : memref<8x128xf32, #tpu.memory_space<vmem>>, vector<8x128xf32>
      tpu.vector_store %arg6[%c0_11, %c0_12], %12 {strides = array<i32>} : memref<8x128xf32, #tpu.memory_space<vmem>>, vector<8x128xf32>,
    } else {
    }
    %c0 = arith.constant 0 : index
    %c0_1 = arith.constant 0 : index
    %3 = vector.load %arg6[%c0, %c0_1] : memref<8x128xf32, #tpu.memory_space<vmem>>, vector<8x128xf32>
    %c0_2 = arith.constant 0 : index
    %c0_3 = arith.constant 0 : index
    %4 = vector.load %arg3[%c0_2, %c0_3] : memref<8x128xbf16, #tpu.memory_space<vmem>>, vector<8x128xbf16>
    %c0_4 = arith.constant 0 : index
    %c0_5 = arith.constant 0 : index
    %5 = vector.load %arg4[%c0_4, %c0_5] : memref<128x128xbf16, #tpu.memory_space<vmem>>, vector<128x128xbf16>
    %cst = arith.constant dense<0.000000e+00> : vector<8x128xf32>
    %6 = tpu.matmul %4, %5, %cst {dimension_numbers = #tpu.dot_dimension_numbers<[1], [0], [0], [1], [0, 0, 1, 1], [], []>} : vector<8x128xbf16>, vector<128x128xbf16>, vector<8x128xf32> -> vector<8x128xf32>
    %7 = arith.addf %3, %6 : vector<8x128xf32>
    %c0_6 = arith.constant 0 : index
    %c0_7 = arith.constant 0 : index
    %8 = vector.load %arg6[%c0_6, %c0_7] : memref<8x128xf32, #tpu.memory_space<vmem>>, vector<8x128xf32>
    tpu.vector_store %arg6[%c0_6, %c0_7], %7 {strides = array<i32>} : memref<8x128xf32, #tpu.memory_space<vmem>>, vector<8x128xf32>,
    %c0_i32_8 = arith.constant 0 : i32
    %9 = arith.cmpi eq, %arg2, %c0_i32_8 : i32
    %10 = arith.extui %9 : i1 to i32
    %c0_i32_9 = arith.constant 0 : i32
    %11 = arith.cmpi ne, %10, %c0_i32_9 : i32
    scf.if %11 {
      %c0_10 = arith.constant 0 : index
      %c0_11 = arith.constant 0 : index
      %12 = vector.load %arg6[%c0_10, %c0_11] : memref<8x128xf32, #tpu.memory_space<vmem>>, vector<8x128xf32>
      %c0_12 = arith.constant 0 : index
      %c0_13 = arith.constant 0 : index
      %13 = vector.load %arg5[%c0_12, %c0_13] : memref<1x128xf32, #tpu.memory_space<vmem>>, vector<1x128xf32>
      %14 = vector.broadcast %13 : vector<1x128xf32> to vector<8x128xf32>
      %15 = arith.addf %12, %14 : vector<8x128xf32>
      %c0_14 = arith.constant 0 : index
      %c0_15 = arith.constant 0 : index
      %16 = vector.load %arg6[%c0_14, %c0_15] : memref<8x128xf32, #tpu.memory_space<vmem>>, vector<8x128xf32>
      tpu.vector_store %arg6[%c0_14, %c0_15], %15 {strides = array<i32>} : memref<8x128xf32, #tpu.memory_space<vmem>>, vector<8x128xf32>,
    } else {
    }
    return
  }
  func.func @transform_0(%arg0: i32, %arg1: i32, %arg2: i32) -> (i32, i32) {
    %c0_i32 = arith.constant 0 : i32
    return %arg0, %arg2 : i32, i32
  }
  func.func @transform_1(%arg0: i32, %arg1: i32, %arg2: i32) -> (i32, i32) {
    %c0_i32 = arith.constant 0 : i32
    return %arg2, %arg1 : i32, i32
  }
  func.func @transform_2(%arg0: i32, %arg1: i32, %arg2: i32) -> (i32, i32) {
    %c0_i32 = arith.constant 0 : i32
    %c0_i32_0 = arith.constant 0 : i32
    return %c0_i32, %arg1 : i32, i32
  }
  func.func @transform_3(%arg0: i32, %arg1: i32, %arg2: i32) -> (i32, i32) {
    %c0_i32 = arith.constant 0 : i32
    return %arg0, %arg1 : i32, i32
  }
}

</mosaic_0001>

<llo_original>
// kernel: tpu_custom_call.1
$region0: #{tpu_custom_call.1}
  #allocation0 [shape = 'u32[]', space=smem, size = 0x4, offset = 0x4, fixed_abs, tag = 'smem constant byte address 0x4 - core index']
  #allocation1 [shape = 'u32[72,128]{1,0:T(1,128)}', space=vmem, size = 0x9000, scoped, tag = 'internal scratch']
  %s0 = inlined_call_operand.hbm [shape: bf16[16,128], index: 0, kind: input, shape index: {}]
  %s1 = inlined_call_operand.hbm [shape: bf16[128,128], index: 1, kind: input, shape index: {}]
  %s2 = inlined_call_operand.vmem [shape: f32[1,128], index: 2, kind: input, shape index: {}]
  %s3 = inlined_call_operand.hbm [shape: f32[16,128], index: 3, kind: output, shape index: {}]
  %s4 = sld [smem:[#allocation0]]
  $region61: #{tpu_custom_call.1} parent=0
    _
  %s6 = ssub.s32 1, %s4
  %s7 = scalar_select 0, %s6, %s4
  $region1: #{tpu_custom_call.1} parent=0
    #allocation2 [shape = 'u8[4096]{0}', space=vmem, size = 0x1000, scoped, tag = 'input window, operand 0']
    #allocation3 [shape = 's32[2]{0}', space=sflag, size = 0x8, scoped, tag = 'scoped memory for tpu_custom_call.1']
    #allocation4 [shape = 's32[2]{0}', space=sflag, size = 0x8, scoped, tag = 'scoped memory for tpu_custom_call.1']
    #allocation5 [shape = 'u8[32768]{0}', space=vmem, size = 0x8000, scoped, tag = 'input window, operand 1, single buffered']
    #allocation6 [shape = 's32[1]{0}', space=sflag, size = 0x4, scoped, tag = 'scoped memory for tpu_custom_call.1']
    #allocation7 [shape = 'u8[8192]{0}', space=vmem, size = 0x2000, scoped, tag = 'output window, operand 0']
    %8 = vsyncpa [#allocation3], 0
    %s9 = scalar_lea.sflag [#allocation3], 1
    %10 = vsyncpa %s9, 0
    %11 = vsyncpa [#allocation6], 0
    %12 = vsyncpa [#allocation4], 0
    %s13 = scalar_lea.sflag [#allocation4], 1
    %14 = vsyncpa %s13, 0
    loop: start=0, step=1, limit=4
    $region2: #{tpu_custom_call.1} parent=1 // loop_pre_header
      _
    $region3: #{tpu_custom_call.1} parent=1 // loop_header
      %s16 = sphi 0, %s20
      %p17 = scmp.ge.s32.totalorder %s16, 4
      %s23 = sphi 0, %s42
      %s24 = sphi 0, %s38
      %s25 = sphi 0, %s34
      %s26 = sphi 0, %s23
      %s27 = sphi 0, %s24
      %s28 = sphi 0, %s25
      %s29 = sphi 0, %s26
      %s30 = sphi 0, %s27
      %s31 = sphi 0, %s28
      %s47 = sphi 0, %s49
      %s50 = sphi 0, %s47
      %s51 = sphi 0, %s50
      %s67 = sphi 0, %s51
      %s75 = sphi 0, %s77
      %s78 = sphi 0, %s75
      %s79 = sphi 0, %s78
      %s95 = sphi 0, %s79
      %s101 = sphi 0, %s103
      %s104 = sphi 0, %s101
      %s105 = sphi 0, %s104
      %s121 = sphi 0, %s105
      %s129 = sphi 0, %s131
      %s132 = sphi 0, %s129
      %s133 = sphi 0, %s132
      %s149 = sphi 0, %s133
    $region4: #{tpu_custom_call.1} parent=1 // loop_header_branch
      %19 = sbr.rel (%p17) target = $region8
    $region5: #{tpu_custom_call.1} parent=1 // loop_body
      %s21 = ssub.s32 %s16, 1
      %s22 = ssub.s32 %s16, 2
      %s32 = sadd.s32 1, %s25
      %p33 = scmp.ge.s32.totalorder %s32, 1
      %s34 = scalar_select %p33, 0, %s32
      %s35 = sadd.s32 1, %s24
      %s36 = scalar_select %p33, %s35, %s24
      %p37 = scmp.ge.s32.totalorder %s36, 1
      %s38 = scalar_select %p37, 0, %s36
      %s39 = sadd.s32 1, %s23
      %s40 = scalar_select %p37, %s39, %s23
      %p41 = scmp.ge.s32.totalorder %s40, 2
      %s42 = scalar_select %p41, 0, %s40
      %s43 = ssub.s32 %s23, %s42
      %s44 = ssub.s32 %s25, %s34
      %s45 = sor.u32 %s43, %s44
      %p46 = scmp.eq.s32.totalorder %s45, 0
      %s48 = sadd.s32 %s47, 1
      %s49 = scalar_select %p46, %s47, %s48
      %p52 = pneg %p46
      %p53 = scmp.eq.s32.totalorder %s16, 1
      %p54 = por %p52, %p53
      %p55 = scmp.ne.s32.totalorder %s47, %s50
      %p56 = scmp.eq.s32.totalorder %s16, 0
      %p57 = por %p55, %p56
      %p58 = scmp.ne.s32.totalorder %s47, %s50
      %p59 = scmp.eq.s32.totalorder %s21, 1
      %p60 = por %p58, %p59
      %p61 = scmp.ne.s32.totalorder %s50, %s51
      %p62 = scmp.eq.s32.totalorder %s21, 0
      %p63 = por %p61, %p62
      %p64 = scmp.ne.s32.totalorder %s50, %s51
      %p65 = scmp.eq.s32.totalorder %s22, 1
      %p66 = por %p64, %p65
      %p68 = scmp.ne.s32.totalorder %s51, %s67
      %p69 = scmp.eq.s32.totalorder %s22, 0
      %p70 = por %p68, %p69
      %s71 = ssub.s32 %s25, %s34
      %s72 = ssub.s32 %s24, %s38
      %s73 = sor.u32 %s71, %s72
      %p74 = scmp.eq.s32.totalorder %s73, 0
      %s76 = sadd.s32 %s75, 1
      %s77 = scalar_select %p74, %s75, %s76
      %p80 = pneg %p74
      %p81 = scmp.eq.s32.totalorder %s16, 1
      %p82 = por %p80, %p81
      %p83 = scmp.ne.s32.totalorder %s75, %s78
      %p84 = scmp.eq.s32.totalorder %s16, 0
      %p85 = por %p83, %p84
      %p86 = scmp.ne.s32.totalorder %s75, %s78
      %p87 = scmp.eq.s32.totalorder %s21, 1
      %p88 = por %p86, %p87
      %p89 = scmp.ne.s32.totalorder %s78, %s79
      %p90 = scmp.eq.s32.totalorder %s21, 0
      %p91 = por %p89, %p90
      %p92 = scmp.ne.s32.totalorder %s78, %s79
      %p93 = scmp.eq.s32.totalorder %s22, 1
      %p94 = por %p92, %p93
      %p96 = scmp.ne.s32.totalorder %s79, %s95
      %p97 = scmp.eq.s32.totalorder %s22, 0
      %p98 = por %p96, %p97
      %s99 = ssub.s32 %s24, %s38
      %p100 = scmp.eq.s32.totalorder %s99, 0
      %s102 = sadd.s32 %s101, 1
      %s103 = scalar_select %p100, %s101, %s102
      %p106 = pneg %p100
      %p107 = scmp.eq.s32.totalorder %s16, 1
      %p108 = por %p106, %p107
      %p109 = scmp.ne.s32.totalorder %s101, %s104
      %p110 = scmp.eq.s32.totalorder %s16, 0
      %p111 = por %p109, %p110
      %p112 = scmp.ne.s32.totalorder %s101, %s104
      %p113 = scmp.eq.s32.totalorder %s21, 1
      %p114 = por %p112, %p113
      %p115 = scmp.ne.s32.totalorder %s104, %s105
      %p116 = scmp.eq.s32.totalorder %s21, 0
      %p117 = por %p115, %p116
      %p118 = scmp.ne.s32.totalorder %s104, %s105
      %p119 = scmp.eq.s32.totalorder %s22, 1
      %p120 = por %p118, %p119
      %p122 = scmp.ne.s32.totalorder %s105, %s121
      %p123 = scmp.eq.s32.totalorder %s22, 0
      %p124 = por %p122, %p123
      %s125 = ssub.s32 %s23, %s42
      %s126 = ssub.s32 %s24, %s38
      %s127 = sor.u32 %s125, %s126
      %p128 = scmp.eq.s32.totalorder %s127, 0
      %s130 = sadd.s32 %s129, 1
      %s131 = scalar_select %p128, %s129, %s130
      %p134 = pneg %p128
      %p135 = scmp.eq.s32.totalorder %s16, 1
      %p136 = por %p134, %p135
      %p137 = scmp.ne.s32.totalorder %s129, %s132
      %p138 = scmp.eq.s32.totalorder %s16, 0
      %p139 = por %p137, %p138
      %p140 = scmp.ne.s32.totalorder %s129, %s132
      %p141 = scmp.eq.s32.totalorder %s21, 1
      %p142 = por %p140, %p141
      %p143 = scmp.ne.s32.totalorder %s132, %s133
      %p144 = scmp.eq.s32.totalorder %s21, 0
      %p145 = por %p143, %p144
      %p146 = scmp.ne.s32.totalorder %s132, %s133
      %p147 = scmp.eq.s32.totalorder %s22, 1
      %p148 = por %p146, %p147
      %p150 = scmp.ne.s32.totalorder %s133, %s149
      %p151 = scmp.eq.s32.totalorder %s22, 0
      %p152 = por %p150, %p151
      %p153 = scmp.le.s32.totalorder 1, %s16
      %p154 = scmp.lt.s32.totalorder %s16, 3
      %p155 = pnand %p153, %p154
      %p156 = pneg %p155
      // Predicated region
      $region9: #{tpu_custom_call.1} parent=5 // pred_check
        _
      $region10: #{tpu_custom_call.1} parent=5 // pred_check_branch
        %158 = sbr.rel (%p155) target = $region12
      $region11: #{tpu_custom_call.1} parent=5 // pred_region
        %s159 = ssub.s32 %s16, 1
        // Predicated region
        $region13: #{tpu_custom_call.1} parent=11 // pred_check
          %p160 = pneg %p91
        $region14: #{tpu_custom_call.1} parent=11 // pred_check_branch
          %162 = sbr.rel (%p160) target = $region16
        $region15: #{tpu_custom_call.1} parent=11 // pred_region
          %s163 = smul.u32 16, %s28
          %165 = vsyncadd [#allocation6], 0
          %s166 = sadd.s32 %s27, %s163
          %s167 = smul.addr %s166, 4
          %s168 = scalar_lea.hbm %s1, %s167
          %s169 = sshll.u32 %s168, 4
          %s170 = int_to_ptr.hbm [resolvable:$true] %s169
          %s171 = sshll.u32 [#allocation5], 4
          %s172 = int_to_ptr.vmem [resolvable:$true] %s171
          %177 = dma.hbm_to_vmem [thread:$0]  %s170, 1024, %s172, [#allocation6], 64, 64, 4
        $region16: #{tpu_custom_call.1} parent=11 // pred_fallthru
          _
        // Predicated region
        $region17: #{tpu_custom_call.1} parent=11 // pred_check
          %p178 = pneg %p117
        $region18: #{tpu_custom_call.1} parent=11 // pred_check_branch
          %180 = sbr.rel (%p178) target = $region20
        $region19: #{tpu_custom_call.1} parent=11 // pred_region
          %p181 = scmp.lt.s32.totalorder %s27, 0
          %s182 = scalar_select %p181, %s27, 0
          %s183 = scalar_lea.vmem %s2, %s182
        $region20: #{tpu_custom_call.1} parent=11 // pred_fallthru
          _
      $region12: #{tpu_custom_call.1} parent=5 // pred_fallthru
        _
      %p184 = scmp.lt.s32.totalorder %s16, 2
      // Predicated region
      $region21: #{tpu_custom_call.1} parent=5 // pred_check
        %p185 = pneg %p184
      $region22: #{tpu_custom_call.1} parent=5 // pred_check_branch
        %187 = sbr.rel (%p185) target = $region24
      $region23: #{tpu_custom_call.1} parent=5 // pred_region
        // Predicated region
        $region25: #{tpu_custom_call.1} parent=23 // pred_check
          %p188 = pneg %p57
        $region26: #{tpu_custom_call.1} parent=23 // pred_check_branch
          %190 = sbr.rel (%p188) target = $region28
        $region27: #{tpu_custom_call.1} parent=23 // pred_region
          %s191 = sand.u32 %s47, 1
          %s192 = scalar_lea.sflag [#allocation3], %s191
          %s193 = sand.u32 %s47, 1
          %s194 = smul.addr %s193, 4
          %s195 = scalar_lea.vmem [#allocation2], %s194
          %197 = vsyncadd %s192, 0
          %s198 = sadd.s32 %s25, %s23
          %s199 = smul.addr %s198, 4
          %s200 = scalar_lea.hbm %s0, %s199
          %s202 = sshll.u32 %s200, 4
          %s203 = int_to_ptr.hbm [resolvable:$true] %s202
          %s204 = sshll.u32 %s195, 4
          %s205 = int_to_ptr.vmem [resolvable:$true] %s204
          %207 = dma.hbm_to_vmem [thread:$0]  %s203, 64, %s205, %s192
        $region28: #{tpu_custom_call.1} parent=23 // pred_fallthru
          _
      $region24: #{tpu_custom_call.1} parent=5 // pred_fallthru
        _
      %p208 = scmp.le.s32.totalorder 1, %s16
      %p209 = scmp.lt.s32.totalorder %s16, 3
      %p210 = pnand %p208, %p209
      %p211 = pneg %p210
      // Predicated region
      $region29: #{tpu_custom_call.1} parent=5 // pred_check
        _
      $region30: #{tpu_custom_call.1} parent=5 // pred_check_branch
        %213 = sbr.rel (%p210) target = $region32
      $region31: #{tpu_custom_call.1} parent=5 // pred_region
        %s214 = ssub.s32 %s16, 1
        %s215 = sand.u32 %s50, 1
        %s216 = scalar_lea.sflag [#allocation3], %s215
        %s217 = sand.u32 %s50, 1
        %s218 = smul.addr %s217, 4
        %s219 = scalar_lea.vmem [#allocation2], %s218
        // Predicated region
        $region33: #{tpu_custom_call.1} parent=31 // pred_check
          %p220 = pneg %p63
        $region34: #{tpu_custom_call.1} parent=31 // pred_check_branch
          %222 = sbr.rel (%p220) target = $region36
        $region35: #{tpu_custom_call.1} parent=31 // pred_region
          %224 = dma.done %s216, 64
        $region36: #{tpu_custom_call.1} parent=31 // pred_fallthru
          _
        // Predicated region
        $region37: #{tpu_custom_call.1} parent=31 // pred_check
          %p225 = pneg %p91
        $region38: #{tpu_custom_call.1} parent=31 // pred_check_branch
          %227 = sbr.rel (%p225) target = $region40
        $region39: #{tpu_custom_call.1} parent=31 // pred_region
          %229 = dma.done [#allocation6], 1024
        $region40: #{tpu_custom_call.1} parent=31 // pred_fallthru
          _
        %s230 = sand.u32 %s50, 1
        %s231 = scalar_lea.sflag [#allocation3], %s230
        %s232 = sand.u32 %s50, 1
        %s233 = smul.addr %s232, 4
        %s234 = scalar_lea.vmem [#allocation2], %s233
        %p235 = pneg %p63
        %p236 = pneg %p60
        %p237 = pneg %p91
        %p238 = pneg %p88
        %p239 = scmp.lt.s32.totalorder %s27, 0
        %s240 = scalar_select %p239, %s27, 0
        %s241 = scalar_lea.vmem %s2, %s240
        %p242 = pneg %p117
        %p243 = pneg %p114
        %p244 = pneg %p145
        %p245 = pneg %p142
        %s246 = sand.u32 %s132, 1
        %s247 = scalar_lea.sflag [#allocation4], %s246
        %s248 = sand.u32 %s132, 1
        %s249 = smul.addr %s248, 8
        %s250 = scalar_lea.vmem [#allocation7], %s249
        %s251 = smul.u32 16, %s28
        %p252 = scmp.lt.s32.totalorder %s27, 0
        %s253 = scalar_select %p252, %s27, 0
        %s254 = scalar_lea.vmem %s2, %s253
        %p255 = scmp.eq.s32.totalorder %s28, 0
        // Predicated region
        $region41: #{tpu_custom_call.1} parent=31 // pred_check
          %p256 = pneg %p255
        $region42: #{tpu_custom_call.1} parent=31 // pred_check_branch
          %258 = sbr.rel (%p256) target = $region44
        $region43: #{tpu_custom_call.1} parent=31 // pred_region
          %259 = vst [vmem:[%s250] sm:$0xff] 0.0
        $region44: #{tpu_custom_call.1} parent=31 // pred_fallthru
          _
        %v260 = vld [vmem:[%s250] sm:$0xff]
        %v261 = vld [vmem:[%s219] sm:$0xf]
        %v262 = vld [vmem:[#allocation5] sm:$0xf]
        %v263 = vld [vmem:[#allocation5 + $0x4] sm:$0xf]
        %v264 = vld [vmem:[#allocation5 + $0x8] sm:$0xf]
        %v265 = vld [vmem:[#allocation5 + $0xc] sm:$0xf]
        %v266 = vld [vmem:[#allocation5 + $0x10] sm:$0xf]
        %v267 = vld [vmem:[#allocation5 + $0x14] sm:$0xf]
        %v268 = vld [vmem:[#allocation5 + $0x18] sm:$0xf]
        %v269 = vld [vmem:[#allocation5 + $0x1c] sm:$0xf]
        %v270 = vld [vmem:[#allocation5 + $0x20] sm:$0xf]
        %v271 = vld [vmem:[#allocation5 + $0x24] sm:$0xf]
        %v272 = vld [vmem:[#allocation5 + $0x28] sm:$0xf]
        %v273 = vld [vmem:[#allocation5 + $0x2c] sm:$0xf]
        %v274 = vld [vmem:[#allocation5 + $0x30] sm:$0xf]
        %v275 = vld [vmem:[#allocation5 + $0x34] sm:$0xf]
        %v276 = vld [vmem:[#allocation5 + $0x38] sm:$0xf]
        %v277 = vld [vmem:[#allocation5 + $0x3c] sm:$0xf]
        %v294 = vunpack.c.l.b16 %v262
        %v295 = vunpack.c.l.b16 %v263
        %v296 = vunpack.c.l.b16 %v264
        %v297 = vunpack.c.l.b16 %v265
        %v298 = vunpack.c.l.b16 %v266
        %v299 = vunpack.c.l.b16 %v267
        %v300 = vunpack.c.l.b16 %v268
        %v301 = vunpack.c.l.b16 %v269
        %v302 = vunpack.c.l.b16 %v270
        %v303 = vunpack.c.l.b16 %v271
        %v304 = vunpack.c.l.b16 %v272
        %v305 = vunpack.c.l.b16 %v273
        %v306 = vunpack.c.l.b16 %v274
        %v307 = vunpack.c.l.b16 %v275
        %v308 = vunpack.c.l.b16 %v276
        %v309 = vunpack.c.l.b16 %v277
        %v310 = vpack.c.b16 %v295, %v294
        %v311 = vpack.c.b16 %v297, %v296
        %v312 = vpack.c.b16 %v299, %v298
        %v313 = vpack.c.b16 %v301, %v300
        %v314 = vpack.c.b16 %v303, %v302
        %v315 = vpack.c.b16 %v305, %v304
        %v316 = vpack.c.b16 %v307, %v306
        %v317 = vpack.c.b16 %v309, %v308
        %326 = vmatpush.bf16.msra.mxu0 %v317
        %327 = vmatpush.bf16.msra.mxu0 %v316
        %328 = vmatpush.bf16.msra.mxu0 %v315
        %329 = vmatpush.bf16.msra.mxu0 %v314
        %330 = vmatpush.bf16.msra.mxu0 %v313
        %331 = vmatpush.bf16.msra.mxu0 %v312
        %332 = vmatpush.bf16.msra.mxu0 %v311
        %333 = vmatpush.bf16.msra.mxu0 %v310
        %334 = vmatmul.bf16.gmra.mxu0 %v261
        %v335 = vpop.f32.mrf.mxu0
        %v336 = vadd.f32 0.0, %v335
        %v337 = vpop.f32.mrf.mxu0
        %338 = vdwg.mxu0
        %v339 = vadd.f32 %v260, %v336
        %340 = vst [vmem:[%s250] sm:$0xff] %v339
        // Predicated region
        $region45: #{tpu_custom_call.1} parent=31 // pred_check
          %p341 = pneg %p255
        $region46: #{tpu_custom_call.1} parent=31 // pred_check_branch
          %343 = sbr.rel (%p341) target = $region48
        $region47: #{tpu_custom_call.1} parent=31 // pred_region
          %v344 = vld [vmem:[%s250] sm:$0xff]
          %v345 = vld [vmem:[%s254] sm:$0x1]
          %v347 = vperm.slane %v345, 0
          %v349 = vadd.f32 %v344, %v347
          %350 = vst [vmem:[%s250] sm:$0xff] %v349
        $region48: #{tpu_custom_call.1} parent=31 // pred_fallthru
          _
        %s351 = sand.u32 %s132, 1
        %s352 = scalar_lea.sflag [#allocation4], %s351
        %s353 = sand.u32 %s132, 1
        %s354 = smul.addr %s353, 8
        %s355 = scalar_lea.vmem [#allocation7], %s354
        // Predicated region
        $region49: #{tpu_custom_call.1} parent=31 // pred_check
          %p356 = pneg %p142
        $region50: #{tpu_custom_call.1} parent=31 // pred_check_branch
          %358 = sbr.rel (%p356) target = $region52
        $region51: #{tpu_custom_call.1} parent=31 // pred_region
          %360 = vsyncadd %s352, 0
          %s361 = sadd.s32 %s27, %s26
          %s362 = smul.addr %s361, 8
          %s363 = scalar_lea.hbm %s3, %s362
          %s365 = sshll.u32 %s355, 4
          %s366 = int_to_ptr.vmem [resolvable:$true] %s365
          %s367 = sshll.u32 %s363, 4
          %s368 = int_to_ptr.hbm [resolvable:$true] %s367
          %370 = dma.vmem_to_hbm [thread:$0]  %s366, 128, %s368, %s352
        $region52: #{tpu_custom_call.1} parent=31 // pred_fallthru
          _
      $region32: #{tpu_custom_call.1} parent=5 // pred_fallthru
        _
      %p371 = scmp.le.s32.totalorder 2, %s16
      // Predicated region
      $region53: #{tpu_custom_call.1} parent=5 // pred_check
        %p372 = pneg %p371
      $region54: #{tpu_custom_call.1} parent=5 // pred_check_branch
        %374 = sbr.rel (%p372) target = $region56
      $region55: #{tpu_custom_call.1} parent=5 // pred_region
        %s375 = ssub.s32 %s16, 2
        // Predicated region
        $region57: #{tpu_custom_call.1} parent=55 // pred_check
          %p376 = pneg %p148
        $region58: #{tpu_custom_call.1} parent=55 // pred_check_branch
          %378 = sbr.rel (%p376) target = $region60
        $region59: #{tpu_custom_call.1} parent=55 // pred_region
          %s379 = sand.u32 %s133, 1
          %s380 = scalar_lea.sflag [#allocation4], %s379
          %s381 = sand.u32 %s133, 1
          %s382 = smul.addr %s381, 8
          %s383 = scalar_lea.vmem [#allocation7], %s382
          %385 = dma.done %s380, 128
        $region60: #{tpu_custom_call.1} parent=55 // pred_fallthru
          _
      $region56: #{tpu_custom_call.1} parent=5 // pred_fallthru
        _
    $region6: #{tpu_custom_call.1} parent=1 // loop_footer
      %s20 = sadd.s32 1, %s16
    $region7: #{tpu_custom_call.1} parent=1 // loop_footer_branch
      %15 = sbr.rel target = $region3
    $region8: #{tpu_custom_call.1} parent=1 // loop_exit
      _
    %386 = vsyncpa [#allocation3], 1
    %s387 = scalar_lea.sflag [#allocation3], 1
    %388 = vsyncpa %s387, 1
    %389 = vsyncpa [#allocation6], 1
    %390 = vsyncpa [#allocation4], 1
    %s391 = scalar_lea.sflag [#allocation4], 1
    %392 = vsyncpa %s391, 1

</llo_original>
